<compile_context>
chip_gen: v6e
topology: v6e:2x2x1
jax: 0.10.0
libtpu: 0.0.40
codegen_flags: <defaults>
</compile_context>

<pallas_src>
import math

import jax
import jax.numpy as jnp
from jax import lax
from jax.experimental import pallas as pl
from jax.experimental.pallas import tpu as pltpu

LN_EPS = 1e-5
BN_EPS = 1e-5
_LANE = 128     # lane width (last dim)
_SUBLANE = 8    # sublane width (second-to-last dim, f32)


def _round_up(n, m):
    return ((n + m - 1) // m) * m


def _gelu(x, approximate):
    if approximate:
        # tanh approximation -> EUP (separate VLIW slot; cheap when VALU-bound)
        return jax.nn.gelu(x, approximate=True)
    # exact GELU: 0.5 * x * (1 + erf(x / sqrt(2)))  (PyTorch default approximate='none')
    return 0.5 * x * (1.0 + lax.erf(x * (1.0 / math.sqrt(2.0))))


def _make_kernel(f_out_true, f_out_p, compute_dtype, approximate_gelu, identity_shortcut):
    inv_f = 1.0 / float(f_out_true)   # LayerNorm over the TRUE feature count, not padded
    # exact-erf GELU stays in f32; tanh GELU runs in compute_dtype (bf16 VALU/EUP on v6e/v7x)
    gelu_dtype = compute_dtype if approximate_gelu else jnp.float32

    def kernel(x_ref,
               wcat_ref, b1_ref,        # [w1 | ws] concatenated (in, out); Linear-1 bias
               gln_ref, bln_ref,        # LayerNorm affine (zero-padded! see note below)
               w2_ref, bres_ref,        # Linear-2 with eval-BN folded; (b2_folded + bs)
               o_ref):
        x = x_ref[...].astype(compute_dtype)          # (tm, F_in_p); cast is a no-op if pre-cast

        # --- fused Linear-1 + shortcut Linear: one MXU pass over the shared LHS x ---
        hs = jnp.dot(x, wcat_ref[...], preferred_element_type=jnp.float32)
        if identity_shortcut:
            h = hs + b1_ref[...]                      # (tm, F_out_p), f32
            s = x_ref[...].astype(jnp.float32)        # identity shortcut (F_in == F_out)
        else:
            # lane-aligned static slices (F_out_p % 128 == 0)
            h = hs[:, :f_out_p] + b1_ref[...]
            s = hs[:, f_out_p:]

        # --- single-pass LayerNorm over the true F_out ---
        # padded cols of h are exact zeros (w1/b1 zero-padded) so they don't perturb s1/s2.
        # NOTE(numerics): E[h^2]-E[h]^2 can cancel if |mean| >> std; f32 accumulation keeps
        # this benign here — switch to the two-pass form if tolerances ever tighten.
        s1 = jnp.sum(h, axis=-1, keepdims=True)
        s2 = jnp.sum(h * h, axis=-1, keepdims=True)
        mu = s1 * inv_f
        var = s2 * inv_f - mu * mu
        h = (h - mu) * lax.rsqrt(var + LN_EPS)
        # gamma/beta MUST be zero-padded so padded lanes return to exactly 0 here.
        h = h * gln_ref[...] + bln_ref[...]

        # --- GELU (tanh form -> EUP; bf16 on v6e/v7x) ---
        h = _gelu(h.astype(gelu_dtype), approximate_gelu)

        # --- Dropout(p=0.3): identity in inference mode ---
        # TODO(synk): training-mode dropout would need pltpu.prng_seed + stateful_bernoulli.

        # --- Linear-2 (MXU); eval BatchNorm1d already folded into w2/bres at pack time ---
        h2 = jnp.dot(h.astype(compute_dtype), w2_ref[...],
                     preferred_element_type=jnp.float32)

        # --- residual add + single folded bias (b2_folded + bs) + final GELU ---
        z = h2 + s + bres_ref[...]
        o_ref[...] = _gelu(z.astype(gelu_dtype), approximate_gelu).astype(o_ref.dtype)

    return kernel


def prepare_params(params, *, compute_dtype=jnp.bfloat16):
    """One-time weight packing (hoisted out of the per-call path).

    Folds eval-mode BatchNorm1d into Linear-2, pre-transposes weights to (in, out),
    concatenates [w1 | ws] along the output dim, zero-pads features to multiples of 128,
    and casts matmul operands to `compute_dtype`.  Call once; reuse across calls.
    """
    w1 = params["w1"]
    F_out, F_in = w1.shape
    F_in_p = _round_up(F_in, _LANE)
    F_out_p = _round_up(F_out, _LANE)

    # eval-mode BatchNorm1d fold into Linear-2 (frozen running stats)
    scale = params["g_bn"].reshape(-1) * lax.rsqrt(params["rv"].reshape(-1) + BN_EPS)
    w2f = params["w2"] * scale[:, None]                                    # torch (out, in)
    b2f = (params["b2"].reshape(-1) - params["rm"].reshape(-1)) * scale + params["b_bn"].reshape(-1)

    identity_shortcut = ("ws" not in params) or (params["ws"] is None)

    def pad2(a, r, c):
        return jnp.pad(a, ((0, r - a.shape[0]), (0, c - a.shape[1])))

    w1t = pad2(w1.T, F_in_p, F_out_p)                                      # (F_in_p, F_out_p)
    if identity_shortcut:
        assert F_in == F_out, "Identity shortcut requires in_features == out_features"
        wcat = w1t
        b_res = b2f
    else:
        wst = pad2(params["ws"].T, F_in_p, F_out_p)
        wcat = jnp.concatenate([w1t, wst], axis=1)                         # (F_in_p, 2*F_out_p)
        b_res = b2f + params["bs"].reshape(-1)                             # folded b2 + bs
    w2t = pad2(w2f.T, F_out_p, F_out_p)

    def pad_row(v):
        # ZERO padding is load-bearing for gamma/beta: padded lanes must stay exactly 0
        # after the LN affine (the LN stats divide by the true F_out).
        v = jnp.reshape(v, (1, -1)).astype(jnp.float32)
        return jnp.pad(v, ((0, 0), (0, F_out_p - v.shape[1])))

    return dict(
        wcat=wcat.astype(compute_dtype),
        w2=w2t.astype(compute_dtype),
        b1=pad_row(params["b1"]),
        g_ln=pad_row(params["g_ln"]),
        b_ln=pad_row(params["b_ln"]),
        b_res=pad_row(b_res),
        f_in=F_in, f_out=F_out, f_in_p=F_in_p, f_out_p=F_out_p,
        identity_shortcut=identity_shortcut,
        compute_dtype=compute_dtype,
    )


def residual_block(x, packed, *, block_rows=512, approximate_gelu=True,
                   single_buffer_residents=None, use_core_parallel=True):
    """x: (B, F_in) float32 -> (B, F_out) float32 (eval-mode ResidualBlock).

    `packed` comes from prepare_params(); weights are not repacked per call.
    """
    B, F_in = x.shape
    assert F_in == packed["f_in"], (F_in, packed["f_in"])
    compute_dtype = packed["compute_dtype"]
    F_out, F_in_p, F_out_p = packed["f_out"], packed["f_in_p"], packed["f_out_p"]
    wcat_cols = packed["wcat"].shape[1]
    wbytes = jnp.dtype(compute_dtype).itemsize

    # bf16 packs 16 rows per sublane group -> 16-align bf16 row tiles; 8 for f32.
    row_align = 16 if wbytes == 2 else _SUBLANE
    tm = min(_round_up(B, row_align), _round_up(block_rows, row_align))
    B_p = _round_up(B, tm)
    num_tiles = B_p // tm

    # Only pad/cast x in the wrapper when actually needed; otherwise pass x as-is and let
    # the kernel cast in-register (saves a full extra x HBM read+write on aligned shapes).
    needs_pad = (B_p != B) or (F_in_p != F_in)
    if needs_pad:
        x_in = jnp.pad(x, ((0, B_p - B), (0, F_in_p - F_in))).astype(compute_dtype)
    else:
        x_in = x

    # ---- VMEM budget (explicit vmem_limit_bytes instead of relying on the default) ----
    resident_bytes = (F_in_p * wcat_cols + F_out_p * F_out_p) * wbytes + 4 * F_out_p * 4
    if single_buffer_residents is None:
        # Residents never change block index, so double-buffering them is pure VMEM waste;
        # only bother overriding the pipeline mode when the waste is material (large F).
        single_buffer_residents = (2 * resident_bytes) > (8 << 20)
    res_bufs = 1 if single_buffer_residents else 2

    x_itemsize = jnp.dtype(x_in.dtype).itemsize
    tile_bytes = 2 * tm * F_in_p * x_itemsize + 2 * tm * F_out_p * 4   # double-buffered x/out
    scratch_est = 6 * tm * max(F_out_p, wcat_cols) * 4                 # f32 intermediates headroom
    need = res_bufs * resident_bytes + tile_bytes + scratch_est
    # Cap: v7x only has 64 MiB/TC physical VMEM — very large F should instead tile the
    # output-feature dim (add an N grid axis) rather than keep full weights resident.
    vmem_limit = int(min(96 << 20, max(need + (need >> 1), 32 << 20)))

    def resident(shape):
        # Weights/biases: same block every grid step -> DMA'd once, stay in VMEM.
        if single_buffer_residents:
            return pl.BlockSpec(shape, lambda i: (0, 0), pipeline_mode=pl.Buffered(buffer_count=1))
        return pl.BlockSpec(shape, lambda i: (0, 0))

    # CORE_PARALLEL actually shards grid steps across v7x's two TensorCores
    # ("parallel" vs "arbitrary" has near-zero codegen effect); needs >=2 tiles of work.
    if use_core_parallel and num_tiles >= 2:
        dim_sem = (pltpu.CORE_PARALLEL,)
    else:
        dim_sem = ("parallel",)

    kernel = _make_kernel(F_out, F_out_p, compute_dtype, approximate_gelu,
                          packed["identity_shortcut"])

    grid_spec = pltpu.PrefetchScalarGridSpec(
        num_scalar_prefetch=0,
        grid=(num_tiles,),
        in_specs=[
            pl.BlockSpec((tm, F_in_p), lambda i: (i, 0)),   # x: batch-tiled, double-buffered
            resident((F_in_p, wcat_cols)),                  # [w1 | ws] fused weight
            resident((1, F_out_p)),                         # b1
            resident((1, F_out_p)),                         # gamma_ln (zero-padded)
            resident((1, F_out_p)),                         # beta_ln  (zero-padded)
            resident((F_out_p, F_out_p)),                   # w2 (BN folded)
            resident((1, F_out_p)),                         # b_res = b2_folded + bs
        ],
        out_specs=pl.BlockSpec((tm, F_out_p), lambda i: (i, 0)),
    )

    out_p = pl.pallas_call(
        kernel,
        out_shape=jax.ShapeDtypeStruct((B_p, F_out_p), jnp.float32),
        grid_spec=grid_spec,
        compiler_params=pltpu.CompilerParams(
            dimension_semantics=dim_sem,
            vmem_limit_bytes=vmem_limit,
        ),
    )(x_in, packed["wcat"], packed["b1"], packed["g_ln"], packed["b_ln"],
      packed["w2"], packed["b_res"])

    if (B_p, F_out_p) != (B, F_out):
        out_p = out_p[:B, :F_out]
    return out_p


def init_params(key, in_features, out_features):
    """Deterministic init mirroring PyTorch defaults, with non-trivial LN/BN parameters
    and running stats so the eval-mode BN fold is actually exercised."""
    ks = jax.random.split(key, 12)

    def lin(kw, kb, fan_in, fan_out):
        bound = 1.0 / math.sqrt(fan_in)
        w = jax.random.uniform(kw, (fan_out, fan_in), jnp.float32, -bound, bound)
        b = jax.random.uniform(kb, (1, fan_out), jnp.float32, -bound, bound)
        return w, b

    w1, b1 = lin(ks[0], ks[1], in_features, out_features)
    w2, b2 = lin(ks[2], ks[3], out_features, out_features)
    ws, bs = lin(ks[4], ks[5], in_features, out_features)
    f = (1, out_features)
    return dict(
        w1=w1, b1=b1,
        g_ln=1.0 + 0.1 * jax.random.normal(ks[6], f, jnp.float32),
        b_ln=0.1 * jax.random.normal(ks[7], f, jnp.float32),
        w2=w2, b2=b2,
        g_bn=1.0 + 0.1 * jax.random.normal(ks[8], f, jnp.float32),
        b_bn=0.1 * jax.random.normal(ks[9], f, jnp.float32),
        rm=0.1 * jax.random.normal(ks[10], f, jnp.float32),
        rv=1.0 + 0.2 * jax.random.uniform(ks[11], f, jnp.float32),
        ws=ws, bs=bs,
    )


def _reference(x, p):
    """Pure-JAX f32 reference matching the PyTorch module in eval mode."""
    h = x @ p["w1"].T + p["b1"]
    mu = jnp.mean(h, axis=-1, keepdims=True)
    var = jnp.mean((h - mu) ** 2, axis=-1, keepdims=True)
    h = (h - mu) / jnp.sqrt(var + LN_EPS) * p["g_ln"] + p["b_ln"]
    h = jax.nn.gelu(h, approximate=False)
    h = h @ p["w2"].T + p["b2"]
    h = (h - p["rm"]) / jnp.sqrt(p["rv"] + BN_EPS) * p["g_bn"] + p["b_bn"]
    s = x @ p["ws"].T + p["bs"]
    return jax.nn.gelu(h + s, approximate=False)


if __name__ == "__main__":
    in_features, out_features, batch = 32, 64, 8

    key = jax.random.PRNGKey(0)
    k_x, k_p = jax.random.split(key)
    x = jax.random.normal(k_x, (batch, in_features), jnp.float32)
    params = init_params(k_p, in_features, out_features)

    ref = _reference(x, params)

    # f32 path, exact-erf GELU — tight check of the structural changes
    # (fused [w1|ws] matmul, BN fold, folded residual bias, padding, 1-pass LN).
    packed_f32 = prepare_params(params, compute_dtype=jnp.float32)
    out_f32 = jax.block_until_ready(
        residual_block(x, packed_f32, approximate_gelu=False))
    assert out_f32.shape == (batch, out_features), out_f32.shape
    err_f32 = float(jnp.max(jnp.abs(out_f32 - ref)))
    assert jnp.allclose(out_f32, ref, atol=1e-4, rtol=1e-4), err_f32

    # bf16 MXU path (production default): tanh GELU (EUP slot), bf16 epilogue.
    packed_bf16 = prepare_params(params, compute_dtype=jnp.bfloat16)
    out_bf16 = jax.block_until_ready(residual_block(x, packed_bf16))
    assert out_bf16.shape == (batch, out_features), out_bf16.shape
    err_bf16 = float(jnp.max(jnp.abs(out_bf16 - ref)))
    assert jnp.allclose(out_bf16, ref, atol=6e-2, rtol=6e-2), err_bf16

    print("KERNEL_OK")
</pallas_src>

<mosaic_0001>
module attributes {stable_mosaic.version = 11 : i64} {
  func.func @kernel(%arg0: i32, %arg1: memref<8x128xf32, #tpu.memory_space<vmem>>, %arg2: memref<128x256xf32, #tpu.memory_space<vmem>>, %arg3: memref<1x128xf32, #tpu.memory_space<vmem>>, %arg4: memref<1x128xf32, #tpu.memory_space<vmem>>, %arg5: memref<1x128xf32, #tpu.memory_space<vmem>>, %arg6: memref<128x128xf32, #tpu.memory_space<vmem>>, %arg7: memref<1x128xf32, #tpu.memory_space<vmem>>, %arg8: memref<8x128xf32, #tpu.memory_space<vmem>>) attributes {dimension_semantics = [#tpu.dimension_semantics<parallel>], iteration_bounds = array<i64: 1>, scalar_prefetch = 0 : i64, scratch_operands = 0 : i64, tpu.core_type = #tpu.core_type<tc>, window_params = [{transform_indices = @transform_0, window_bounds = array<i64: 8, 128>}, {pipeline_mode = #tpu.pipeline_mode<synchronous>, transform_indices = @transform_1, window_bounds = array<i64: 128, 256>}, {pipeline_mode = #tpu.pipeline_mode<synchronous>, transform_indices = @transform_2, window_bounds = array<i64: 1, 128>}, {pipeline_mode = #tpu.pipeline_mode<synchronous>, transform_indices = @transform_3, window_bounds = array<i64: 1, 128>}, {pipeline_mode = #tpu.pipeline_mode<synchronous>, transform_indices = @transform_4, window_bounds = array<i64: 1, 128>}, {pipeline_mode = #tpu.pipeline_mode<synchronous>, transform_indices = @transform_5, window_bounds = array<i64: 128, 128>}, {pipeline_mode = #tpu.pipeline_mode<synchronous>, transform_indices = @transform_6, window_bounds = array<i64: 1, 128>}, {transform_indices = @transform_7, window_bounds = array<i64: 8, 128>}]} {
    %c0 = arith.constant 0 : index
    %c0_0 = arith.constant 0 : index
    %0 = vector.load %arg1[%c0, %c0_0] : memref<8x128xf32, #tpu.memory_space<vmem>>, vector<8x128xf32>
    %c0_1 = arith.constant 0 : index
    %c0_2 = arith.constant 0 : index
    %1 = vector.load %arg2[%c0_1, %c0_2] : memref<128x256xf32, #tpu.memory_space<vmem>>, vector<128x256xf32>
    %cst = arith.constant dense<0.000000e+00> : vector<8x256xf32>
    %2 = tpu.matmul %0, %1, %cst {dimension_numbers = #tpu.dot_dimension_numbers<[1], [0], [0], [1], [0, 0, 1, 1], [], []>} : vector<8x128xf32>, vector<128x256xf32>, vector<8x256xf32> -> vector<8x256xf32>
    %3 = vector.extract_strided_slice %2 {offsets = [0, 0], sizes = [8, 128], strides = [1, 1]} : vector<8x256xf32> to vector<8x128xf32>
    %c0_3 = arith.constant 0 : index
    %c0_4 = arith.constant 0 : index
    %4 = vector.load %arg3[%c0_3, %c0_4] : memref<1x128xf32, #tpu.memory_space<vmem>>, vector<1x128xf32>
    %5 = vector.broadcast %4 : vector<1x128xf32> to vector<8x128xf32>
    %6 = arith.addf %3, %5 : vector<8x128xf32>
    %7 = vector.extract_strided_slice %2 {offsets = [0, 128], sizes = [8, 128], strides = [1, 1]} : vector<8x256xf32> to vector<8x128xf32>
    %cst_5 = arith.constant dense<0.000000e+00> : vector<8xf32>
    %8 = vector.multi_reduction <add>, %6, %cst_5 [1] : vector<8x128xf32> to vector<8xf32>
    %9 = vector.shape_cast %8 : vector<8xf32> to vector<8x1xf32>
    %10 = arith.mulf %6, %6 : vector<8x128xf32>
    %cst_6 = arith.constant dense<0.000000e+00> : vector<8xf32>
    %11 = vector.multi_reduction <add>, %10, %cst_6 [1] : vector<8x128xf32> to vector<8xf32>
    %12 = vector.shape_cast %11 : vector<8xf32> to vector<8x1xf32>
    %cst_7 = arith.constant 1.562500e-02 : f32
    %13 = vector.broadcast %cst_7 : f32 to vector<8x1xf32>
    %14 = arith.mulf %9, %13 : vector<8x1xf32>
    %cst_8 = arith.constant 1.562500e-02 : f32
    %15 = vector.broadcast %cst_8 : f32 to vector<8x1xf32>
    %16 = arith.mulf %12, %15 : vector<8x1xf32>
    %17 = arith.mulf %14, %14 : vector<8x1xf32>
    %18 = arith.subf %16, %17 : vector<8x1xf32>
    %19 = vector.broadcast %14 : vector<8x1xf32> to vector<8x128xf32>
    %20 = arith.subf %6, %19 : vector<8x128xf32>
    %cst_9 = arith.constant 9.99999974E-6 : f32
    %21 = vector.broadcast %cst_9 : f32 to vector<8x1xf32>
    %22 = arith.addf %18, %21 : vector<8x1xf32>
    %23 = math.rsqrt %22 : vector<8x1xf32>
    %24 = vector.broadcast %23 : vector<8x1xf32> to vector<8x128xf32>
    %25 = arith.mulf %20, %24 : vector<8x128xf32>
    %c0_10 = arith.constant 0 : index
    %c0_11 = arith.constant 0 : index
    %26 = vector.load %arg4[%c0_10, %c0_11] : memref<1x128xf32, #tpu.memory_space<vmem>>, vector<1x128xf32>
    %27 = vector.broadcast %26 : vector<1x128xf32> to vector<8x128xf32>
    %28 = arith.mulf %25, %27 : vector<8x128xf32>
    %c0_12 = arith.constant 0 : index
    %c0_13 = arith.constant 0 : index
    %29 = vector.load %arg5[%c0_12, %c0_13] : memref<1x128xf32, #tpu.memory_space<vmem>>, vector<1x128xf32>
    %30 = vector.broadcast %29 : vector<1x128xf32> to vector<8x128xf32>
    %31 = arith.addf %28, %30 : vector<8x128xf32>
    %cst_14 = arith.constant 5.000000e-01 : f32
    %32 = vector.broadcast %cst_14 : f32 to vector<8x128xf32>
    %33 = arith.mulf %32, %31 : vector<8x128xf32>
    %cst_15 = arith.constant 0.707106769 : f32
    %34 = vector.broadcast %cst_15 : f32 to vector<8x128xf32>
    %35 = arith.mulf %31, %34 : vector<8x128xf32>
    %36 = math.erf %35 : vector<8x128xf32>
    %cst_16 = arith.constant 1.000000e+00 : f32
    %37 = vector.broadcast %cst_16 : f32 to vector<8x128xf32>
    %38 = arith.addf %37, %36 : vector<8x128xf32>
    %39 = arith.mulf %33, %38 : vector<8x128xf32>
    %c0_17 = arith.constant 0 : index
    %c0_18 = arith.constant 0 : index
    %40 = vector.load %arg6[%c0_17, %c0_18] : memref<128x128xf32, #tpu.memory_space<vmem>>, vector<128x128xf32>
    %cst_19 = arith.constant dense<0.000000e+00> : vector<8x128xf32>
    %41 = tpu.matmul %39, %40, %cst_19 {dimension_numbers = #tpu.dot_dimension_numbers<[1], [0], [0], [1], [0, 0, 1, 1], [], []>} : vector<8x128xf32>, vector<128x128xf32>, vector<8x128xf32> -> vector<8x128xf32>
    %42 = arith.addf %41, %7 : vector<8x128xf32>
    %c0_20 = arith.constant 0 : index
    %c0_21 = arith.constant 0 : index
    %43 = vector.load %arg7[%c0_20, %c0_21] : memref<1x128xf32, #tpu.memory_space<vmem>>, vector<1x128xf32>
    %44 = vector.broadcast %43 : vector<1x128xf32> to vector<8x128xf32>
    %45 = arith.addf %42, %44 : vector<8x128xf32>
    %cst_22 = arith.constant 5.000000e-01 : f32
    %46 = vector.broadcast %cst_22 : f32 to vector<8x128xf32>
    %47 = arith.mulf %46, %45 : vector<8x128xf32>
    %cst_23 = arith.constant 0.707106769 : f32
    %48 = vector.broadcast %cst_23 : f32 to vector<8x128xf32>
    %49 = arith.mulf %45, %48 : vector<8x128xf32>
    %50 = math.erf %49 : vector<8x128xf32>
    %cst_24 = arith.constant 1.000000e+00 : f32
    %51 = vector.broadcast %cst_24 : f32 to vector<8x128xf32>
    %52 = arith.addf %51, %50 : vector<8x128xf32>
    %53 = arith.mulf %47, %52 : vector<8x128xf32>
    %c0_25 = arith.constant 0 : index
    %c0_26 = arith.constant 0 : index
    %54 = vector.load %arg8[%c0_25, %c0_26] : memref<8x128xf32, #tpu.memory_space<vmem>>, vector<8x128xf32>
    tpu.vector_store %arg8[%c0_25, %c0_26], %53 {strides = array<i32>} : memref<8x128xf32, #tpu.memory_space<vmem>>, vector<8x128xf32>,
    return
  }
  func.func @transform_0(%arg0: i32) -> (i32, i32) {
    %c0_i32 = arith.constant 0 : i32
    %c0_i32_0 = arith.constant 0 : i32
    return %arg0, %c0_i32 : i32, i32
  }
  func.func @transform_1(%arg0: i32) -> (i32, i32) {
    %c0_i32 = arith.constant 0 : i32
    %c0_i32_0 = arith.constant 0 : i32
    %c0_i32_1 = arith.constant 0 : i32
    return %c0_i32, %c0_i32_0 : i32, i32
  }
  func.func @transform_2(%arg0: i32) -> (i32, i32) {
    %c0_i32 = arith.constant 0 : i32
    %c0_i32_0 = arith.constant 0 : i32
    %c0_i32_1 = arith.constant 0 : i32
    return %c0_i32, %c0_i32_0 : i32, i32
  }
  func.func @transform_3(%arg0: i32) -> (i32, i32) {
    %c0_i32 = arith.constant 0 : i32
    %c0_i32_0 = arith.constant 0 : i32
    %c0_i32_1 = arith.constant 0 : i32
    return %c0_i32, %c0_i32_0 : i32, i32
  }
  func.func @transform_4(%arg0: i32) -> (i32, i32) {
    %c0_i32 = arith.constant 0 : i32
    %c0_i32_0 = arith.constant 0 : i32
    %c0_i32_1 = arith.constant 0 : i32
    return %c0_i32, %c0_i32_0 : i32, i32
  }
  func.func @transform_5(%arg0: i32) -> (i32, i32) {
    %c0_i32 = arith.constant 0 : i32
    %c0_i32_0 = arith.constant 0 : i32
    %c0_i32_1 = arith.constant 0 : i32
    return %c0_i32, %c0_i32_0 : i32, i32
  }
  func.func @transform_6(%arg0: i32) -> (i32, i32) {
    %c0_i32 = arith.constant 0 : i32
    %c0_i32_0 = arith.constant 0 : i32
    %c0_i32_1 = arith.constant 0 : i32
    return %c0_i32, %c0_i32_0 : i32, i32
  }
  func.func @transform_7(%arg0: i32) -> (i32, i32) {
    %c0_i32 = arith.constant 0 : i32
    %c0_i32_0 = arith.constant 0 : i32
    return %arg0, %c0_i32 : i32, i32
  }
}

</mosaic_0001>

<llo_original>
// kernel: tpu_custom_call.1
$region0: #{tpu_custom_call.1}
  #allocation0 [shape = 'u32[]', space=smem, size = 0x4, offset = 0x4, fixed_abs, tag = 'smem constant byte address 0x4 - core index']
  #allocation1 [shape = 'u32[144,128]{1,0:T(1,128)}', space=vmem, size = 0x12000, scoped, tag = 'internal scratch']
  %s0 = inlined_call_operand.hbm [shape: f32[8,128], index: 0, kind: input, shape index: {}]
  %s1 = inlined_call_operand.hbm [shape: f32[128,256], index: 1, kind: input, shape index: {}]
  %s2 = inlined_call_operand.vmem [shape: f32[1,128], index: 2, kind: input, shape index: {}]
  %s3 = inlined_call_operand.vmem [shape: f32[1,128], index: 3, kind: input, shape index: {}]
  %s4 = inlined_call_operand.vmem [shape: f32[1,128], index: 4, kind: input, shape index: {}]
  %s5 = inlined_call_operand.hbm [shape: f32[128,128], index: 5, kind: input, shape index: {}]
  %s6 = inlined_call_operand.vmem [shape: f32[1,128], index: 6, kind: input, shape index: {}]
  %s7 = inlined_call_operand.hbm [shape: f32[8,128], index: 7, kind: output, shape index: {}]
  %s8 = sld [smem:[#allocation0]]
  $region50: #{tpu_custom_call.1} parent=0
    _
  %s10 = ssub.s32 1, %s8
  %s11 = scalar_select 0, %s10, %s8
  $region1: #{tpu_custom_call.1} parent=0
    #allocation2 [shape = 'u8[4096]{0}', space=vmem, size = 0x1000, scoped, tag = 'input window, operand 0, single buffered']
    #allocation3 [shape = 's32[1]{0}', space=sflag, size = 0x4, scoped, tag = 'scoped memory for tpu_custom_call.1']
    #allocation4 [shape = 's32[1]{0}', space=sflag, size = 0x4, scoped, tag = 'scoped memory for tpu_custom_call.1']
    #allocation5 [shape = 'u8[131072]{0}', space=vmem, size = 0x20000, scoped, tag = 'input window, operand 1, single buffered']
    #allocation6 [shape = 's32[1]{0}', space=sflag, size = 0x4, scoped, tag = 'scoped memory for tpu_custom_call.1']
    #allocation7 [shape = 'u8[65536]{0}', space=vmem, size = 0x10000, scoped, tag = 'input window, operand 5, single buffered']
    #allocation8 [shape = 'u8[4096]{0}', space=vmem, size = 0x1000, scoped, tag = 'output window, operand 0, single buffered']
    %12 = vsyncpa [#allocation3], 0
    %13 = vsyncpa [#allocation6], 0
    %14 = vsyncpa [#allocation4], 0
    // Predicated region
    $region2: #{tpu_custom_call.1} parent=1 // pred_check
      _
    $region3: #{tpu_custom_call.1} parent=1 // pred_check_branch
      %16 = sbr.rel (0) target = $region5
    $region4: #{tpu_custom_call.1} parent=1 // pred_region
      %s18 = ssub.s32 128, 128
      %19 = vsyncadd [#allocation3], %s18
      %s21 = sshll.u32 [#allocation2], 4
      %s22 = int_to_ptr.vmem [resolvable:$true] %s21
      %24 = dma.hbm_to_vmem [thread:$0]  %s0, 128, %s22, [#allocation3]
    $region5: #{tpu_custom_call.1} parent=1 // pred_fallthru
      _
    // Predicated region
    $region6: #{tpu_custom_call.1} parent=1 // pred_check
      _
    $region7: #{tpu_custom_call.1} parent=1 // pred_check_branch
      %26 = sbr.rel (0) target = $region9
    $region8: #{tpu_custom_call.1} parent=1 // pred_region
      %s28 = ssub.s32 4096, 4096
      %29 = vsyncadd [#allocation6], %s28
      %s30 = sshll.u32 [#allocation5], 4
      %s31 = int_to_ptr.vmem [resolvable:$true] %s30
      %36 = dma.hbm_to_vmem [thread:$0]  %s1, 4096, %s31, [#allocation6], 256, 256, 16
    $region9: #{tpu_custom_call.1} parent=1 // pred_fallthru
      _
    // Predicated region
    $region10: #{tpu_custom_call.1} parent=1 // pred_check
      _
    $region11: #{tpu_custom_call.1} parent=1 // pred_check_branch
      %38 = sbr.rel (0) target = $region13
    $region12: #{tpu_custom_call.1} parent=1 // pred_region
      _
    $region13: #{tpu_custom_call.1} parent=1 // pred_fallthru
      _
    // Predicated region
    $region14: #{tpu_custom_call.1} parent=1 // pred_check
      _
    $region15: #{tpu_custom_call.1} parent=1 // pred_check_branch
      %40 = sbr.rel (0) target = $region17
    $region16: #{tpu_custom_call.1} parent=1 // pred_region
      _
    $region17: #{tpu_custom_call.1} parent=1 // pred_fallthru
      _
    // Predicated region
    $region18: #{tpu_custom_call.1} parent=1 // pred_check
      _
    $region19: #{tpu_custom_call.1} parent=1 // pred_check_branch
      %42 = sbr.rel (0) target = $region21
    $region20: #{tpu_custom_call.1} parent=1 // pred_region
      _
    $region21: #{tpu_custom_call.1} parent=1 // pred_fallthru
      _
    // Predicated region
    $region22: #{tpu_custom_call.1} parent=1 // pred_check
      _
    $region23: #{tpu_custom_call.1} parent=1 // pred_check_branch
      %44 = sbr.rel (0) target = $region25
    $region24: #{tpu_custom_call.1} parent=1 // pred_region
      %s46 = ssub.s32 2048, 2048
      %47 = vsyncadd [#allocation6], %s46
      %s48 = sshll.u32 [#allocation7], 4
      %s49 = int_to_ptr.vmem [resolvable:$true] %s48
      %54 = dma.hbm_to_vmem [thread:$0]  %s5, 2048, %s49, [#allocation6], 128, 128, 8
    $region25: #{tpu_custom_call.1} parent=1 // pred_fallthru
      _
    // Predicated region
    $region26: #{tpu_custom_call.1} parent=1 // pred_check
      _
    $region27: #{tpu_custom_call.1} parent=1 // pred_check_branch
      %56 = sbr.rel (0) target = $region29
    $region28: #{tpu_custom_call.1} parent=1 // pred_region
      _
    $region29: #{tpu_custom_call.1} parent=1 // pred_fallthru
      _
    // Predicated region
    $region30: #{tpu_custom_call.1} parent=1 // pred_check
      _
    $region31: #{tpu_custom_call.1} parent=1 // pred_check_branch
      %58 = sbr.rel (0) target = $region33
    $region32: #{tpu_custom_call.1} parent=1 // pred_region
      %59 = dma.done [#allocation3], 128
    $region33: #{tpu_custom_call.1} parent=1 // pred_fallthru
      _
    // Predicated region
    $region34: #{tpu_custom_call.1} parent=1 // pred_check
      _
    $region35: #{tpu_custom_call.1} parent=1 // pred_check_branch
      %61 = sbr.rel (0) target = $region37
    $region36: #{tpu_custom_call.1} parent=1 // pred_region
      %62 = dma.done [#allocation6], 4096
    $region37: #{tpu_custom_call.1} parent=1 // pred_fallthru
      _
    // Predicated region
    $region38: #{tpu_custom_call.1} parent=1 // pred_check
      _
    $region39: #{tpu_custom_call.1} parent=1 // pred_check_branch
      %64 = sbr.rel (0) target = $region41
    $region40: #{tpu_custom_call.1} parent=1 // pred_region
      %65 = dma.done [#allocation6], 2048
    $region41: #{tpu_custom_call.1} parent=1 // pred_fallthru
      _
    %v66 = vld [vmem:[#allocation2] sm:$0xff]
    %v67 = vld [vmem:[#allocation5] sm:$0xff]
    %v68 = vld [vmem:[#allocation5 + $0x8] sm:$0xff]
    %v69 = vld [vmem:[#allocation5 + $0x10] sm:$0xff]
    %v70 = vld [vmem:[#allocation5 + $0x18] sm:$0xff]
    %v71 = vld [vmem:[#allocation5 + $0x20] sm:$0xff]
    %v72 = vld [vmem:[#allocation5 + $0x28] sm:$0xff]
    %v73 = vld [vmem:[#allocation5 + $0x30] sm:$0xff]
    %v74 = vld [vmem:[#allocation5 + $0x38] sm:$0xff]
    %v75 = vld [vmem:[#allocation5 + $0x40] sm:$0xff]
    %v76 = vld [vmem:[#allocation5 + $0x48] sm:$0xff]
    %v77 = vld [vmem:[#allocation5 + $0x50] sm:$0xff]
    %v78 = vld [vmem:[#allocation5 + $0x58] sm:$0xff]
    %v79 = vld [vmem:[#allocation5 + $0x60] sm:$0xff]
    %v80 = vld [vmem:[#allocation5 + $0x68] sm:$0xff]
    %v81 = vld [vmem:[#allocation5 + $0x70] sm:$0xff]
    %v82 = vld [vmem:[#allocation5 + $0x78] sm:$0xff]
    %v83 = vld [vmem:[#allocation5 + $0x80] sm:$0xff]
    %v84 = vld [vmem:[#allocation5 + $0x88] sm:$0xff]
    %v85 = vld [vmem:[#allocation5 + $0x90] sm:$0xff]
    %v86 = vld [vmem:[#allocation5 + $0x98] sm:$0xff]
    %v87 = vld [vmem:[#allocation5 + $0xa0] sm:$0xff]
    %v88 = vld [vmem:[#allocation5 + $0xa8] sm:$0xff]
    %v89 = vld [vmem:[#allocation5 + $0xb0] sm:$0xff]
    %v90 = vld [vmem:[#allocation5 + $0xb8] sm:$0xff]
    %v91 = vld [vmem:[#allocation5 + $0xc0] sm:$0xff]
    %v92 = vld [vmem:[#allocation5 + $0xc8] sm:$0xff]
    %v93 = vld [vmem:[#allocation5 + $0xd0] sm:$0xff]
    %v94 = vld [vmem:[#allocation5 + $0xd8] sm:$0xff]
    %v95 = vld [vmem:[#allocation5 + $0xe0] sm:$0xff]
    %v96 = vld [vmem:[#allocation5 + $0xe8] sm:$0xff]
    %v97 = vld [vmem:[#allocation5 + $0xf0] sm:$0xff]
    %v98 = vld [vmem:[#allocation5 + $0xf8] sm:$0xff]
    %99 = vmatprep.subr.mxu0 %v98
    %100 = vmatpush1.msra.mxu0 %v97
    %101 = vmatprep.subr.mxu0 %v96
    %102 = vmatpush1.msra.mxu0 %v95
    %103 = vmatprep.subr.mxu0 %v94
    %104 = vmatpush1.msra.mxu0 %v93
    %105 = vmatprep.subr.mxu0 %v92
    %106 = vmatpush1.msra.mxu0 %v91
    %107 = vmatprep.subr.mxu0 %v90
    %108 = vmatpush1.msra.mxu0 %v89
    %109 = vmatprep.subr.mxu0 %v88
    %110 = vmatpush1.msra.mxu0 %v87
    %111 = vmatprep.subr.mxu0 %v86
    %112 = vmatpush1.msra.mxu0 %v85
    %113 = vmatprep.subr.mxu0 %v84
    %114 = vmatpush1.msra.mxu0 %v83
    %115 = vmatprep.subr.mxu0 %v82
    %116 = vmatpush1.msra.mxu0 %v81
    %117 = vmatprep.subr.mxu0 %v80
    %118 = vmatpush1.msra.mxu0 %v79
    %119 = vmatprep.subr.mxu0 %v78
    %120 = vmatpush1.msra.mxu0 %v77
    %121 = vmatprep.subr.mxu0 %v76
    %122 = vmatpush1.msra.mxu0 %v75
    %123 = vmatprep.subr.mxu0 %v74
    %124 = vmatpush1.msra.mxu0 %v73
    %125 = vmatprep.subr.mxu0 %v72
    %126 = vmatpush1.msra.mxu0 %v71
    %127 = vmatprep.subr.mxu0 %v70
    %128 = vmatpush1.msra.mxu0 %v69
    %129 = vmatprep.subr.mxu0 %v68
    %130 = vmatpush1.msra.mxu0 %v67
    %131 = vmatprep.subr.mxu0 0.0
    %132 = vmatpush2.msra.mxu0 0.0
    %133 = vmatprep.subr.mxu0 0.0
    %134 = vmatpush2.msra.mxu0 0.0
    %135 = vmatprep.subr.mxu0 0.0
    %136 = vmatpush2.msra.mxu0 0.0
    %137 = vmatprep.subr.mxu0 0.0
    %138 = vmatpush2.msra.mxu0 0.0
    %139 = vmatprep.subr.mxu0 0.0
    %140 = vmatpush2.msra.mxu0 0.0
    %141 = vmatprep.subr.mxu0 0.0
    %142 = vmatpush2.msra.mxu0 0.0
    %143 = vmatprep.subr.mxu0 0.0
    %144 = vmatpush2.msra.mxu0 0.0
    %145 = vmatprep.subr.mxu0 0.0
    %146 = vmatpush2.msra.mxu0 0.0
    %147 = vmatprep.subr.mxu0 0.0
    %148 = vmatpush2.msra.mxu0 0.0
    %149 = vmatprep.subr.mxu0 0.0
    %150 = vmatpush2.msra.mxu0 0.0
    %151 = vmatprep.subr.mxu0 0.0
    %152 = vmatpush2.msra.mxu0 0.0
    %153 = vmatprep.subr.mxu0 0.0
    %154 = vmatpush2.msra.mxu0 0.0
    %155 = vmatprep.subr.mxu0 0.0
    %156 = vmatpush2.msra.mxu0 0.0
    %157 = vmatprep.subr.mxu0 0.0
    %158 = vmatpush2.msra.mxu0 0.0
    %159 = vmatprep.subr.mxu0 0.0
    %160 = vmatpush2.msra.mxu0 0.0
    %161 = vmatprep.subr.mxu0 0.0
    %162 = vmatpush2.msra.mxu0 0.0
    %163 = vmatprep.mubr.f32.mxu0 0.0
    %164 = vmatmul.mubr.f32.gmra.mxu0 %v66
    %v165 = vpop.f32.mrf.mxu0
    %v166 = vadd.f32 0.0, %v165
    %v167 = vpop.f32.mrf.mxu0
    %v168 = vadd.f32 0.0, %v167
    %169 = vdwg.mxu0
    %v170 = vld [vmem:[%s2] sm:$0x1]
    %v172 = vlaneseq
    %v173 = vshrl.u32 %v172, 7
    %v174 = vsub.s32 0, %v173
    %v175 = vrot.slane %v170, %v174
    %v177 = vadd.f32 %v166, %v175
    %178 = vadd.xlane.f32.xlu0 %v177
    %v179 = vpop.xlane.xlu0 %178
    %v180 = vmul.f32 %v177, %v177
    %181 = vadd.xlane.f32.xlu0 %v180
    %v182 = vpop.xlane.xlu0 %181
    %v183 = vmul.f32 %v179, 0.015625
    %v184 = vmul.f32 %v182, 0.015625
    %v185 = vmul.f32 %v183, %v183
    %v186 = vsub.f32 %v184, %v185
    %v187 = vsub.f32 %v177, %v183
    %v188 = vadd.f32 %v186, 1e-05
    %v189 = vrsqrt.pop %v188
    %v190 = vmul.f32 %v187, %v189
    %v191 = vld [vmem:[%s3] sm:$0x1]
    %v193 = vlaneseq
    %v194 = vshrl.u32 %v193, 7
    %v195 = vsub.s32 0, %v194
    %v196 = vrot.slane %v191, %v195
    %v198 = vmul.f32 %v190, %v196
    %v199 = vld [vmem:[%s4] sm:$0x1]
    %v201 = vlaneseq
    %v202 = vshrl.u32 %v201, 7
    %v203 = vsub.s32 0, %v202
    %v204 = vrot.slane %v199, %v203
    %v206 = vadd.f32 %v198, %v204
    %v207 = vmul.f32 %v206, 0.5
    %v208 = vmul.f32 %v206, 0.70710677
    %v209 = verf.f32.pop %v208
    %v210 = vadd.f32 %v209, 1.0
    %v211 = vmul.f32 %v207, %v210
    %v212 = vld [vmem:[#allocation7] sm:$0xff]
    %v213 = vld [vmem:[#allocation7 + $0x8] sm:$0xff]
    %v214 = vld [vmem:[#allocation7 + $0x10] sm:$0xff]
    %v215 = vld [vmem:[#allocation7 + $0x18] sm:$0xff]
    %v216 = vld [vmem:[#allocation7 + $0x20] sm:$0xff]
    %v217 = vld [vmem:[#allocation7 + $0x28] sm:$0xff]
    %v218 = vld [vmem:[#allocation7 + $0x30] sm:$0xff]
    %v219 = vld [vmem:[#allocation7 + $0x38] sm:$0xff]
    %v220 = vld [vmem:[#allocation7 + $0x40] sm:$0xff]
    %v221 = vld [vmem:[#allocation7 + $0x48] sm:$0xff]
    %v222 = vld [vmem:[#allocation7 + $0x50] sm:$0xff]
    %v223 = vld [vmem:[#allocation7 + $0x58] sm:$0xff]
    %v224 = vld [vmem:[#allocation7 + $0x60] sm:$0xff]
    %v225 = vld [vmem:[#allocation7 + $0x68] sm:$0xff]
    %v226 = vld [vmem:[#allocation7 + $0x70] sm:$0xff]
    %v227 = vld [vmem:[#allocation7 + $0x78] sm:$0xff]
    %228 = vmatprep.subr.mxu0 0.0
    %229 = vmatpush1.msra.mxu0 %v227
    %230 = vmatprep.subr.mxu0 0.0
    %231 = vmatpush1.msra.mxu0 %v226
    %232 = vmatprep.subr.mxu0 0.0
    %233 = vmatpush1.msra.mxu0 %v225
    %234 = vmatprep.subr.mxu0 0.0
    %235 = vmatpush1.msra.mxu0 %v224
    %236 = vmatprep.subr.mxu0 0.0
    %237 = vmatpush1.msra.mxu0 %v223
    %238 = vmatprep.subr.mxu0 0.0
    %239 = vmatpush1.msra.mxu0 %v222
    %240 = vmatprep.subr.mxu0 0.0
    %241 = vmatpush1.msra.mxu0 %v221
    %242 = vmatprep.subr.mxu0 0.0
    %243 = vmatpush1.msra.mxu0 %v220
    %244 = vmatprep.subr.mxu0 0.0
    %245 = vmatpush1.msra.mxu0 %v219
    %246 = vmatprep.subr.mxu0 0.0
    %247 = vmatpush1.msra.mxu0 %v218
    %248 = vmatprep.subr.mxu0 0.0
    %249 = vmatpush1.msra.mxu0 %v217
    %250 = vmatprep.subr.mxu0 0.0
    %251 = vmatpush1.msra.mxu0 %v216
    %252 = vmatprep.subr.mxu0 0.0
    %253 = vmatpush1.msra.mxu0 %v215
    %254 = vmatprep.subr.mxu0 0.0
    %255 = vmatpush1.msra.mxu0 %v214
    %256 = vmatprep.subr.mxu0 0.0
    %257 = vmatpush1.msra.mxu0 %v213
    %258 = vmatprep.subr.mxu0 0.0
    %259 = vmatpush1.msra.mxu0 %v212
    %260 = vmatprep.subr.mxu0 0.0
    %261 = vmatpush2.msra.mxu0 0.0
    %262 = vmatprep.subr.mxu0 0.0
    %263 = vmatpush2.msra.mxu0 0.0
    %264 = vmatprep.subr.mxu0 0.0
    %265 = vmatpush2.msra.mxu0 0.0
    %266 = vmatprep.subr.mxu0 0.0
    %267 = vmatpush2.msra.mxu0 0.0
    %268 = vmatprep.subr.mxu0 0.0
    %269 = vmatpush2.msra.mxu0 0.0
    %270 = vmatprep.subr.mxu0 0.0
    %271 = vmatpush2.msra.mxu0 0.0
    %272 = vmatprep.subr.mxu0 0.0
    %273 = vmatpush2.msra.mxu0 0.0
    %274 = vmatprep.subr.mxu0 0.0
    %275 = vmatpush2.msra.mxu0 0.0
    %276 = vmatprep.subr.mxu0 0.0
    %277 = vmatpush2.msra.mxu0 0.0
    %278 = vmatprep.subr.mxu0 0.0
    %279 = vmatpush2.msra.mxu0 0.0
    %280 = vmatprep.subr.mxu0 0.0
    %281 = vmatpush2.msra.mxu0 0.0
    %282 = vmatprep.subr.mxu0 0.0
    %283 = vmatpush2.msra.mxu0 0.0
    %284 = vmatprep.subr.mxu0 0.0
    %285 = vmatpush2.msra.mxu0 0.0
    %286 = vmatprep.subr.mxu0 0.0
    %287 = vmatpush2.msra.mxu0 0.0
    %288 = vmatprep.subr.mxu0 0.0
    %289 = vmatpush2.msra.mxu0 0.0
    %290 = vmatprep.subr.mxu0 0.0
    %291 = vmatpush2.msra.mxu0 0.0
    %292 = vmatprep.mubr.f32.mxu0 0.0
    %293 = vmatmul.mubr.f32.gmra.mxu0 %v211
    %v294 = vpop.f32.mrf.mxu0
    %v295 = vadd.f32 %v168, %v294
    %v296 = vpop.f32.mrf.mxu0
    %297 = vdwg.mxu0
    %v298 = vld [vmem:[%s6] sm:$0x1]
    %v300 = vlaneseq
    %v301 = vshrl.u32 %v300, 7
    %v302 = vsub.s32 0, %v301
    %v303 = vrot.slane %v298, %v302
    %v305 = vadd.f32 %v295, %v303
    %v306 = vmul.f32 %v305, 0.5
    %v307 = vmul.f32 %v305, 0.70710677
    %v308 = verf.f32.pop %v307
    %v309 = vadd.f32 %v308, 1.0
    %v310 = vmul.f32 %v306, %v309
    %311 = vst [vmem:[#allocation8] sm:$0xff] %v310
    // Predicated region
    $region42: #{tpu_custom_call.1} parent=1 // pred_check
      _
    $region43: #{tpu_custom_call.1} parent=1 // pred_check_branch
      %313 = sbr.rel (0) target = $region45
    $region44: #{tpu_custom_call.1} parent=1 // pred_region
      %s315 = ssub.s32 128, 128
      %316 = vsyncadd [#allocation4], %s315
      %s318 = sshll.u32 [#allocation8], 4
      %s319 = int_to_ptr.vmem [resolvable:$true] %s318
      %321 = dma.vmem_to_hbm [thread:$0]  %s319, 128, %s7, [#allocation4]
    $region45: #{tpu_custom_call.1} parent=1 // pred_fallthru
      _
    // Predicated region
    $region46: #{tpu_custom_call.1} parent=1 // pred_check
      _
    $region47: #{tpu_custom_call.1} parent=1 // pred_check_branch
      %323 = sbr.rel (0) target = $region49
    $region48: #{tpu_custom_call.1} parent=1 // pred_region
      %324 = dma.done [#allocation4], 128
    $region49: #{tpu_custom_call.1} parent=1 // pred_fallthru
      _
    %325 = vsyncpa [#allocation3], 1
    %326 = vsyncpa [#allocation6], 1
    %327 = vsyncpa [#allocation4], 1

</llo_original>
